<compile_context>
chip_gen: v7x
topology: tpu7x:2x2x1
jax: 0.10.0
libtpu: 0.0.40
codegen_flags: <defaults>
</compile_context>

<pallas_src>
import jax
import jax.numpy as jnp
from jax.experimental import pallas as pl
from jax.experimental.pallas import tpu as pltpu

_LANE = 128              # vreg lane width
_MAX_TILE_ROWS = 4096    # 4096 x 128 x 4B = 2 MiB per f32 buffer


def _round_up(x: int, m: int) -> int:
    return ((x + m - 1) // m) * m


def _num_tensorcores_hint() -> int:
    """Best-effort detection of dual-TensorCore chips (v7x)."""
    try:
        kind = jax.devices()[0].device_kind.lower()
    except Exception:
        return 1
    return 2 if ("v7" in kind or "7x" in kind) else 1


def _point_density_kernel(scalars_ref, z_ref, o_ref):
    """scalars_ref: SMEM (3,) f32 = [a, b, c]; z/o: (tile_rows, 128) VMEM tiles.

    out = sigmoid(z + shift) * wf + (1 - wf)
        = a * tanh(0.5*z + c) + b            # 1 EUP op + 2 VPU FMAs
    with a = 0.5*wf, b = 1 - 0.5*wf, c = 0.5*shift.
    """
    a = scalars_ref[0]
    b = scalars_ref[1]
    c = scalars_ref[2]
    # f32 math: required on v5e (no bf16 VPU/EUP), essentially free everywhere
    # since this kernel is HBM-bandwidth bound.
    z = z_ref[...].astype(jnp.float32)
    o_ref[...] = (a * jnp.tanh(0.5 * z + c) + b).astype(o_ref.dtype)


def _window_fac(cur_iter: int, window_start_iters: int, window_iters: int) -> float:
    it = cur_iter - window_start_iters
    if it < 0:
        return 0.0
    elif it >= window_iters:
        return 1.0
    return it / window_iters


def point_density_embedding(
    z_vals: jax.Array,
    *,
    shift: float = 0.0,
    cur_iter: int = 0,
    window_start_iters: int = 0,
    window_iters: int = 0,
    max_tile_rows: int = _MAX_TILE_ROWS,
    output_dtype=None,
    core_parallel: bool | None = None,
) -> jax.Array:
    """Pallas implementation of PointDensityEmbedding.get_sigma + window blend.

    z_vals: [B, N, C] float array (the `sigma`/`in_field` tensor).
    Returns: [B, N, 1] array in `output_dtype` (default: z_vals.dtype).
    """
    B, N, C = z_vals.shape
    out_dtype = jnp.dtype(output_dtype) if output_dtype is not None else z_vals.dtype
    window_fac = _window_fac(cur_iter, window_start_iters, window_iters)

    if window_fac == 0.0:
        # out = sigma * 0 + 1 is constant: skip the HBM read and kernel launch.
        return jnp.ones((B, N, 1), dtype=out_dtype)

    # (a) slice the last channel in the wrapper; C == 1 is a pure reshape.
    z_last = z_vals.reshape(B, N) if C == 1 else z_vals[..., C - 1]
    total = B * N
    rows = pl.cdiv(total, _LANE)

    want_core_parallel = (
        core_parallel if core_parallel is not None else _num_tensorcores_hint() > 1
    )

    # Balanced tiling: padding capped at < 8 rows per tile.
    num_tiles = pl.cdiv(rows, max_tile_rows)
    if want_core_parallel:
        # Make sure both TensorCores get work on dual-TC chips (v7x).
        num_tiles = max(num_tiles, min(4, rows // 8))
    num_tiles = max(num_tiles, 1)
    tile_rows = _round_up(pl.cdiv(rows, num_tiles), 8)
    padded_rows = num_tiles * tile_rows
    padded_total = padded_rows * _LANE
    needs_pad = padded_total != total
    use_core_parallel = want_core_parallel and num_tiles >= 2

    flat = z_last.reshape(total)
    if needs_pad:
        flat = jnp.pad(flat, (0, padded_total - total))
    z2d = flat.reshape(padded_rows, _LANE)

    # Runtime scalars (SMEM): no recompile as window_fac ramps each iteration.
    scalars = jnp.array(
        [0.5 * window_fac, 1.0 - 0.5 * window_fac, 0.5 * shift], dtype=jnp.float32
    )

    in_itemsize = jnp.dtype(z_vals.dtype).itemsize
    out_itemsize = jnp.dtype(out_dtype).itemsize
    # Advisory only; excludes the wrapper-side slice/pad/un-pad XLA passes.
    cost = pl.CostEstimate(
        flops=4 * padded_total,
        transcendentals=padded_total,
        bytes_accessed=padded_total * (in_itemsize + out_itemsize) + 12,
    )

    def _launch(dim_sem):
        return pl.pallas_call(
            _point_density_kernel,
            out_shape=jax.ShapeDtypeStruct((padded_rows, _LANE), out_dtype),
            grid_spec=pltpu.PrefetchScalarGridSpec(
                num_scalar_prefetch=0,
                grid=(num_tiles,),
                in_specs=[
                    pl.BlockSpec(memory_space=pltpu.MemorySpace.SMEM),   # [a, b, c]
                    pl.BlockSpec((tile_rows, _LANE), lambda i: (i, 0)),  # z rows
                ],
                out_specs=pl.BlockSpec((tile_rows, _LANE), lambda i: (i, 0)),
            ),
            compiler_params=pltpu.CompilerParams(
                dimension_semantics=dim_sem,
                # 2 MiB tiles, double-buffered in+out ~= 8 MiB; raise the limit
                # explicitly so v5e's 16 MiB scoped default never binds.
                vmem_limit_bytes=32 << 20,
            ),
            cost_estimate=cost,
        )(scalars, z2d)

    if use_core_parallel:
        try:
            out2d = _launch((pltpu.CORE_PARALLEL,))
        except Exception:
            # Conservative fallback if CORE_PARALLEL is rejected on this chip.
            out2d = _launch(("parallel",))
    else:
        out2d = _launch(("parallel",))

    # Free layout plumbing back to the module's [B, N, 1] output.
    if needs_pad:
        return out2d.reshape(padded_total)[:total].reshape(B, N, 1)
    return out2d.reshape(B, N, 1)


def point_density_embedding_forward(x: dict, render_kwargs: dict, **cfg) -> dict:
    """Dict-in / dict-out wrapper matching the PyTorch forward signature."""
    in_field = cfg.get("in_field", "sigma")
    out_field = cfg.get("out_field", "sigma")
    # `rays` is read but unused by get_sigma in the reference module.
    _ = x.get(cfg.get("rays_name", "rays"), None)
    x = dict(x)
    x[out_field] = point_density_embedding(
        x[in_field],
        shift=cfg.get("shift", 0.0),
        cur_iter=cfg.get("cur_iter", 0),
        window_start_iters=cfg.get("window_start_iters", 0),
        window_iters=cfg.get("window_iters", 0),
        output_dtype=cfg.get("output_dtype", None),
    )
    return x


if __name__ == "__main__":
    key = jax.random.PRNGKey(0)
    k1, k2, k3 = jax.random.split(key, 3)

    B, N, C = 2, 8, 4  # small shapes: 2 ray batches, 8 samples/ray, 4 features
    z_vals = jax.random.normal(k1, (B, N, C), dtype=jnp.float32)
    rays = jax.random.normal(k2, (B, 6), dtype=jnp.float32)  # unused by get_sigma
    x = {"rays": rays, "sigma": z_vals}

    # 1) Mid-ramp window: cur_iter=5, start=2, window_iters=10 -> window_fac = 0.3
    out = point_density_embedding_forward(
        x, {}, shift=0.25, cur_iter=5, window_start_iters=2, window_iters=10
    )
    result = jax.block_until_ready(out["sigma"])
    wf = (5 - 2) / 10
    ref = jax.nn.sigmoid(z_vals[..., -1:] + 0.25) * wf + (1 - wf)
    assert result.shape == (B, N, 1)
    assert jnp.allclose(result, ref, atol=1e-6), "mismatch vs reference (mid window)"

    # 2) Window not started -> constant 1.0 (host short-circuit, no kernel launch).
    out0 = point_density_embedding_forward(
        dict(x), {}, shift=0.25, cur_iter=1, window_start_iters=2, window_iters=10
    )
    r0 = jax.block_until_ready(out0["sigma"])
    assert jnp.allclose(r0, jnp.ones((B, N, 1), jnp.float32)), "mismatch (window=0)"

    # 3) Window fully open -> pure shifted sigmoid.
    out1 = point_density_embedding_forward(
        dict(x), {}, shift=0.25, cur_iter=100, window_start_iters=2, window_iters=10
    )
    r1 = jax.block_until_ready(out1["sigma"])
    ref1 = jax.nn.sigmoid(z_vals[..., -1:] + 0.25)
    assert jnp.allclose(r1, ref1, atol=1e-6), "mismatch vs reference (window=1)"

    # 4) Multi-tile grid + balanced-padding path with a small tile override.
    B2, N2, C2 = 16, 136, 4  # total = 2176 -> 17 rows of 128 lanes -> 3 tiles of 8
    z2 = jax.random.normal(k2, (B2, N2, C2), dtype=jnp.float32)
    r2 = jax.block_until_ready(
        point_density_embedding(
            z2, shift=-0.1, cur_iter=7, window_start_iters=0, window_iters=10,
            max_tile_rows=8,
        )
    )
    wf2 = 7 / 10
    ref2 = jax.nn.sigmoid(z2[..., -1:] - 0.1) * wf2 + (1 - wf2)
    assert r2.shape == (B2, N2, 1)
    assert jnp.allclose(r2, ref2, atol=1e-6), "mismatch vs reference (tiled path)"

    # 5) Zero-copy no-pad fast path: total % 128 == 0, no pad and no un-pad slice.
    B3, N3, C3 = 4, 512, 2  # total = 2048 -> 16 rows -> exact tiles
    z3 = jax.random.normal(k3, (B3, N3, C3), dtype=jnp.float32)
    r3 = jax.block_until_ready(
        point_density_embedding(
            z3, shift=0.5, cur_iter=3, window_start_iters=0, window_iters=4
        )
    )
    wf3 = 3 / 4
    ref3 = jax.nn.sigmoid(z3[..., -1:] + 0.5) * wf3 + (1 - wf3)
    assert r3.shape == (B3, N3, 1)
    assert jnp.allclose(r3, ref3, atol=1e-6), "mismatch vs reference (no-pad path)"

    # 6) Optional bf16 output (halves write-side HBM traffic); compute stays f32.
    rb = jax.block_until_ready(
        point_density_embedding(
            z_vals, shift=0.25, cur_iter=5, window_start_iters=2, window_iters=10,
            output_dtype=jnp.bfloat16,
        )
    )
    assert rb.dtype == jnp.bfloat16
    assert jnp.allclose(rb.astype(jnp.float32), ref, atol=1e-2), "mismatch (bf16 out)"

    print("KERNEL_OK")
</pallas_src>

<mosaic_0001>
module attributes {stable_mosaic.version = 11 : i64} {
  func.func @_point_density_kernel(%arg0: i32, %arg1: memref<3xf32, #tpu.memory_space<smem>>, %arg2: memref<8x128xf32, #tpu.memory_space<vmem>>, %arg3: memref<8x128xf32, #tpu.memory_space<vmem>>) attributes {dimension_semantics = [#tpu.dimension_semantics<parallel>], iteration_bounds = array<i64: 1>, scalar_prefetch = 0 : i64, scratch_operands = 0 : i64, tpu.core_type = #tpu.core_type<tc>, window_params = [{transform_indices = @transform_0, window_bounds = array<i64: 3>}, {transform_indices = @transform_1, window_bounds = array<i64: 8, 128>}, {transform_indices = @transform_2, window_bounds = array<i64: 8, 128>}]} {
    %c0 = arith.constant 0 : index
    %0 = memref.load %arg1[%c0] : memref<3xf32, #tpu.memory_space<smem>>
    %c1 = arith.constant 1 : index
    %1 = memref.load %arg1[%c1] : memref<3xf32, #tpu.memory_space<smem>>
    %c2 = arith.constant 2 : index
    %2 = memref.load %arg1[%c2] : memref<3xf32, #tpu.memory_space<smem>>
    %c0_0 = arith.constant 0 : index
    %c0_1 = arith.constant 0 : index
    %3 = vector.load %arg2[%c0_0, %c0_1] : memref<8x128xf32, #tpu.memory_space<vmem>>, vector<8x128xf32>
    %cst = arith.constant 5.000000e-01 : f32
    %4 = vector.broadcast %cst : f32 to vector<8x128xf32>
    %5 = arith.mulf %4, %3 : vector<8x128xf32>
    %6 = vector.broadcast %2 : f32 to vector<8x128xf32>
    %7 = arith.addf %5, %6 : vector<8x128xf32>
    %8 = math.tanh %7 : vector<8x128xf32>
    %9 = vector.broadcast %0 : f32 to vector<8x128xf32>
    %10 = arith.mulf %9, %8 : vector<8x128xf32>
    %11 = vector.broadcast %1 : f32 to vector<8x128xf32>
    %12 = arith.addf %10, %11 : vector<8x128xf32>
    %c0_2 = arith.constant 0 : index
    %c0_3 = arith.constant 0 : index
    %13 = vector.load %arg3[%c0_2, %c0_3] : memref<8x128xf32, #tpu.memory_space<vmem>>, vector<8x128xf32>
    tpu.vector_store %arg3[%c0_2, %c0_3], %12 {strides = array<i32>} : memref<8x128xf32, #tpu.memory_space<vmem>>, vector<8x128xf32>,
    return
  }
  func.func @transform_0(%arg0: i32) -> i32 {
    %c0_i32 = arith.constant 0 : i32
    %c0_i32_0 = arith.constant 0 : i32
    return %c0_i32 : i32
  }
  func.func @transform_1(%arg0: i32) -> (i32, i32) {
    %c0_i32 = arith.constant 0 : i32
    %c0_i32_0 = arith.constant 0 : i32
    return %arg0, %c0_i32 : i32, i32
  }
  func.func @transform_2(%arg0: i32) -> (i32, i32) {
    %c0_i32 = arith.constant 0 : i32
    %c0_i32_0 = arith.constant 0 : i32
    return %arg0, %c0_i32 : i32, i32
  }
}

</mosaic_0001>

<llo_original>
// kernel: tpu_custom_call.1
$region0: #{tpu_custom_call.1}
  #allocation0 [shape = 'u32[]', space=smem, size = 0x4, offset = 0x4, fixed_abs, tag = 'smem constant byte address 0x4 - core index']
  #allocation1 [shape = 'u32[144,128]{1,0:T(1,128)}', space=vmem, size = 0x12000, scoped, tag = 'internal scratch']
  %s0 = inlined_call_operand.hbm [shape: f32[3], index: 0, kind: input, shape index: {}]
  %s1 = inlined_call_operand.hbm [shape: f32[8,128], index: 1, kind: input, shape index: {}]
  %s2 = inlined_call_operand.hbm [shape: f32[8,128], index: 2, kind: output, shape index: {}]
  %s3 = sld [smem:[#allocation0]]
  $region26: #{tpu_custom_call.1} parent=0
    _
  %s5 = ssub.s32 1, %s3
  %s6 = scalar_select 0, %s5, %s3
  $region1: #{tpu_custom_call.1} parent=0
    #allocation2 [shape = 'u8[512]{0}', space=smem, size = 0x200, scoped, tag = 'input window, operand 0, single buffered']
    #allocation3 [shape = 's32[1]{0}', space=sflag, size = 0x4, scoped, tag = 'scoped memory for tpu_custom_call.1']
    #allocation4 [shape = 's32[1]{0}', space=sflag, size = 0x4, scoped, tag = 'scoped memory for tpu_custom_call.1']
    #allocation5 [shape = 's32[1]{0}', space=sflag, size = 0x4, scoped, tag = 'scoped memory for tpu_custom_call.1']
    #allocation6 [shape = 'u8[4096]{0}', space=vmem, size = 0x1000, scoped, tag = 'input window, operand 1, single buffered']
    #allocation7 [shape = 'u8[4096]{0}', space=vmem, size = 0x1000, scoped, tag = 'output window, operand 0, single buffered']
    %7 = vsyncpa [#allocation5], 0
    %8 = vsyncpa [#allocation3], 0
    %9 = vsyncpa [#allocation4], 0
    // Predicated region
    $region2: #{tpu_custom_call.1} parent=1 // pred_check
      _
    $region3: #{tpu_custom_call.1} parent=1 // pred_check_branch
      %11 = sbr.rel (0) target = $region5
    $region4: #{tpu_custom_call.1} parent=1 // pred_region
      %s13 = ssub.s32 16, 16
      %14 = vsyncadd [#allocation5], %s13
      %17 = dma.hbm_to_smem %s0, 16, [#allocation2], [#allocation5]
    $region5: #{tpu_custom_call.1} parent=1 // pred_fallthru
      _
    // Predicated region
    $region6: #{tpu_custom_call.1} parent=1 // pred_check
      _
    $region7: #{tpu_custom_call.1} parent=1 // pred_check_branch
      %19 = sbr.rel (0) target = $region9
    $region8: #{tpu_custom_call.1} parent=1 // pred_region
      %s21 = ssub.s32 128, 128
      %22 = vsyncadd [#allocation3], %s21
      %s24 = sshll.u32 [#allocation6], 4
      %s25 = int_to_ptr.vmem [resolvable:$true] %s24
      %27 = dma.hbm_to_vmem [thread:$0]  %s1, 128, %s25, [#allocation3]
    $region9: #{tpu_custom_call.1} parent=1 // pred_fallthru
      _
    // Predicated region
    $region10: #{tpu_custom_call.1} parent=1 // pred_check
      _
    $region11: #{tpu_custom_call.1} parent=1 // pred_check_branch
      %29 = sbr.rel (0) target = $region13
    $region12: #{tpu_custom_call.1} parent=1 // pred_region
      %30 = dma.done [#allocation5], 16
    $region13: #{tpu_custom_call.1} parent=1 // pred_fallthru
      _
    // Predicated region
    $region14: #{tpu_custom_call.1} parent=1 // pred_check
      _
    $region15: #{tpu_custom_call.1} parent=1 // pred_check_branch
      %32 = sbr.rel (0) target = $region17
    $region16: #{tpu_custom_call.1} parent=1 // pred_region
      %33 = dma.done [#allocation3], 128
    $region17: #{tpu_custom_call.1} parent=1 // pred_fallthru
      _
    %34 = sfence
    %s35 = sld [smem:[#allocation2]]
    %s36 = sld [smem:[#allocation2 + $0x1]]
    %s37 = sld [smem:[#allocation2 + $0x2]]
    %v38 = vld [vmem:[#allocation6] sm:$0xff]
    %v39 = vmul.f32 %v38, 0.5
    %v40 = vstv %s37
    %v41 = vadd.f32 %v39, %v40
    %v42 = vtanh.pop %v41
    %v43 = vstv %s35
    %v44 = vmul.f32 %v43, %v42
    %v45 = vstv %s36
    %v46 = vadd.f32 %v44, %v45
    %47 = vst [vmem:[#allocation7] sm:$0xff] %v46
    // Predicated region
    $region18: #{tpu_custom_call.1} parent=1 // pred_check
      _
    $region19: #{tpu_custom_call.1} parent=1 // pred_check_branch
      %49 = sbr.rel (0) target = $region21
    $region20: #{tpu_custom_call.1} parent=1 // pred_region
      %s51 = ssub.s32 128, 128
      %52 = vsyncadd [#allocation4], %s51
      %s54 = sshll.u32 [#allocation7], 4
      %s55 = int_to_ptr.vmem [resolvable:$true] %s54
      %57 = dma.vmem_to_hbm [thread:$0]  %s55, 128, %s2, [#allocation4]
    $region21: #{tpu_custom_call.1} parent=1 // pred_fallthru
      _
    // Predicated region
    $region22: #{tpu_custom_call.1} parent=1 // pred_check
      _
    $region23: #{tpu_custom_call.1} parent=1 // pred_check_branch
      %59 = sbr.rel (0) target = $region25
    $region24: #{tpu_custom_call.1} parent=1 // pred_region
      %60 = dma.done [#allocation4], 128
    $region25: #{tpu_custom_call.1} parent=1 // pred_fallthru
      _
    %61 = vsyncpa [#allocation3], 1
    %62 = vsyncpa [#allocation4], 1
    %63 = vsyncpa [#allocation5], 1

</llo_original>
